<compile_context>
chip_gen: v6e
topology: v6e:2x2x1
jax: 0.10.0
libtpu: 0.0.40
codegen_flags: <defaults>
</compile_context>

<pallas_src>
import jax
import jax.numpy as jnp
from jax.experimental import pallas as pl
from jax.experimental.pallas import tpu as pltpu


def _round_up(x, m):
    return ((x + m - 1) // m) * m


def head_kernel(x_ref, w_ref, b_ref, o_ref):
    # x_ref: (TB, D) f32/bf16; w_ref: (D, C_pad) bf16; b_ref: (1, C_pad) f32;
    # o_ref: (TB, C_pad).
    x = x_ref[...].astype(jnp.bfloat16)                 # no-op if x is already bf16
    logits = jnp.dot(x, w_ref[...],                     # plain x @ W on the MXU
                     preferred_element_type=jnp.float32)
    logits = logits + b_ref[...]                        # f32; (1, C_pad) broadcasts

    # Softmax over the class (lane) axis.  Padded columns carry a -1e30 bias,
    # so exp() underflows to exactly 0 and they do not perturb the denominator.
    # NOTE: if B % TB != 0 the trailing out-of-range rows compute softmax on
    # padding -- harmless because all math here is strictly row-wise.
    m = jnp.max(logits, axis=-1, keepdims=True)
    e = jnp.exp(logits - m)
    denom = jnp.sum(e, axis=-1, keepdims=True)
    probs = e / denom                                   # exact normalization

    o_ref[...] = probs.astype(o_ref.dtype)


def prepare_head_params(weight, bias, *, compute_dtype=jnp.bfloat16):
    """One-time (init) param prep.

    weight: (num_classes, dim_in) in PyTorch layout; bias: (num_classes,).
    Returns (w_p, b_p): w_p is (dim_in, C_pad) in `compute_dtype` with zero
    padded columns; b_p is (1, C_pad) f32 with -1e30 in padded entries so
    padded classes get exactly-zero probability after softmax.
    """
    C, D = weight.shape
    C_pad = _round_up(max(C, 128), 128)                 # lane-dense class axis
    w_p = jnp.pad(weight.T.astype(compute_dtype), ((0, 0), (0, C_pad - C)))
    b_p = jnp.pad(bias.astype(jnp.float32), (0, C_pad - C),
                  constant_values=-1e30).reshape(1, C_pad)
    return w_p, b_p


def transformer_basic_head(x, w_p, b_p, *, block_b=512, out_dtype=jnp.float32):
    """Eval-mode forward: softmax(x @ W^T + b).

    x: (B, dim_in) f32 or bf16; (w_p, b_p) from prepare_head_params().
    Returns (B, C_pad) probabilities; columns >= num_classes are exactly 0.
    """
    B, D = x.shape
    Dw, C_pad = w_p.shape
    assert D == Dw, f"dim_in mismatch: x has {D}, weight has {Dw}"

    # Batch tile: multiple of 8 sublanes, capped at block_b, and chosen so the
    # grid has >= 2 steps whenever B >= 16 (lets "parallel" use both v7x TCs).
    TB = min(block_b, max(8, _round_up(pl.cdiv(B, 2), 8)))
    grid = (pl.cdiv(B, TB),)

    return pl.pallas_call(
        head_kernel,
        out_shape=jax.ShapeDtypeStruct((B, C_pad), out_dtype),
        grid_spec=pltpu.PrefetchScalarGridSpec(
            num_scalar_prefetch=0,
            grid=grid,
            in_specs=[
                pl.BlockSpec((TB, D), lambda i: (i, 0)),      # x: streamed per tile
                pl.BlockSpec((D, C_pad), lambda i: (0, 0)),   # weight: VMEM-resident
                pl.BlockSpec((1, C_pad), lambda i: (0, 0)),   # bias: VMEM-resident
            ],
            out_specs=pl.BlockSpec((TB, C_pad), lambda i: (i, 0)),
        ),
        compiler_params=pltpu.CompilerParams(
            dimension_semantics=("parallel",)),
    )(x, w_p, b_p)


if __name__ == "__main__":
    # Small shapes consistent with the head: batch=8, dim_in=32, num_classes=16.
    B, DIM_IN, NUM_CLASSES = 8, 32, 16

    key = jax.random.PRNGKey(0)
    kx, kw = jax.random.split(key)

    x = jax.random.normal(kx, (B, DIM_IN), dtype=jnp.float32)
    # Deterministic parameter init (trunc_normal(std=0.02)-like; zero bias).
    weight = 0.02 * jax.random.normal(kw, (NUM_CLASSES, DIM_IN), dtype=jnp.float32)
    bias = jnp.zeros((NUM_CLASSES,), dtype=jnp.float32)

    # One-time parameter prep (hoisted out of the hot path).
    w_p, b_p = prepare_head_params(weight, bias)

    out_pad = transformer_basic_head(x, w_p, b_p)
    out_pad = jax.block_until_ready(out_pad)

    C_pad = w_p.shape[1]
    assert out_pad.shape == (B, C_pad)

    # Reference check in plain JAX (eval-mode forward: linear + softmax), f32.
    ref = jax.nn.softmax(x @ weight.T + bias, axis=1)
    out = out_pad[:, :NUM_CLASSES]          # consumer-side view for comparison only
    # bf16 MXU operands -> slightly relaxed tolerance vs the f32 reference.
    assert jnp.allclose(out, ref, atol=2e-3, rtol=2e-3)
    # Exact normalization: every row (over all C_pad columns) sums to ~1.
    assert jnp.allclose(jnp.sum(out_pad, axis=1), jnp.ones((B,)), atol=1e-4)
    # Padded classes carry (essentially exactly) zero probability.
    assert bool(jnp.all(out_pad[:, NUM_CLASSES:] < 1e-20))

    print("KERNEL_OK")
</pallas_src>

<mosaic_0001>
module attributes {stable_mosaic.version = 11 : i64} {
  func.func @head_kernel(%arg0: i32, %arg1: memref<8x32xf32, #tpu.memory_space<vmem>>, %arg2: memref<32x128xbf16, #tpu.memory_space<vmem>>, %arg3: memref<1x128xf32, #tpu.memory_space<vmem>>, %arg4: memref<8x128xf32, #tpu.memory_space<vmem>>) attributes {dimension_semantics = [#tpu.dimension_semantics<parallel>], iteration_bounds = array<i64: 1>, scalar_prefetch = 0 : i64, scratch_operands = 0 : i64, tpu.core_type = #tpu.core_type<tc>, window_params = [{transform_indices = @transform_0, window_bounds = array<i64: 8, 32>}, {pipeline_mode = #tpu.pipeline_mode<synchronous>, transform_indices = @transform_1, window_bounds = array<i64: 32, 128>}, {pipeline_mode = #tpu.pipeline_mode<synchronous>, transform_indices = @transform_2, window_bounds = array<i64: 1, 128>}, {transform_indices = @transform_3, window_bounds = array<i64: 8, 128>}]} {
    %c0 = arith.constant 0 : index
    %c0_0 = arith.constant 0 : index
    %0 = vector.load %arg1[%c0, %c0_0] : memref<8x32xf32, #tpu.memory_space<vmem>>, vector<8x32xf32>
    %1 = arith.truncf %0 : vector<8x32xf32> to vector<8x32xbf16>
    %c0_1 = arith.constant 0 : index
    %c0_2 = arith.constant 0 : index
    %2 = vector.load %arg2[%c0_1, %c0_2] : memref<32x128xbf16, #tpu.memory_space<vmem>>, vector<32x128xbf16>
    %cst = arith.constant dense<0.000000e+00> : vector<8x128xf32>
    %3 = tpu.matmul %1, %2, %cst {dimension_numbers = #tpu.dot_dimension_numbers<[1], [0], [0], [1], [0, 0, 1, 1], [], []>} : vector<8x32xbf16>, vector<32x128xbf16>, vector<8x128xf32> -> vector<8x128xf32>
    %c0_3 = arith.constant 0 : index
    %c0_4 = arith.constant 0 : index
    %4 = vector.load %arg3[%c0_3, %c0_4] : memref<1x128xf32, #tpu.memory_space<vmem>>, vector<1x128xf32>
    %5 = vector.broadcast %4 : vector<1x128xf32> to vector<8x128xf32>
    %6 = arith.addf %3, %5 : vector<8x128xf32>
    %cst_5 = arith.constant dense<0xFF800000> : vector<8xf32>
    %7 = vector.multi_reduction <maximumf>, %6, %cst_5 [1] : vector<8x128xf32> to vector<8xf32>
    %8 = vector.shape_cast %7 : vector<8xf32> to vector<8x1xf32>
    %9 = vector.broadcast %8 : vector<8x1xf32> to vector<8x128xf32>
    %10 = arith.subf %6, %9 : vector<8x128xf32>
    %11 = math.exp %10 : vector<8x128xf32>
    %cst_6 = arith.constant dense<0.000000e+00> : vector<8xf32>
    %12 = vector.multi_reduction <add>, %11, %cst_6 [1] : vector<8x128xf32> to vector<8xf32>
    %13 = vector.shape_cast %12 : vector<8xf32> to vector<8x1xf32>
    %14 = vector.broadcast %13 : vector<8x1xf32> to vector<8x128xf32>
    %15 = arith.divf %11, %14 : vector<8x128xf32>
    %c0_7 = arith.constant 0 : index
    %c0_8 = arith.constant 0 : index
    %16 = vector.load %arg4[%c0_7, %c0_8] : memref<8x128xf32, #tpu.memory_space<vmem>>, vector<8x128xf32>
    tpu.vector_store %arg4[%c0_7, %c0_8], %15 {strides = array<i32>} : memref<8x128xf32, #tpu.memory_space<vmem>>, vector<8x128xf32>,
    return
  }
  func.func @transform_0(%arg0: i32) -> (i32, i32) {
    %c0_i32 = arith.constant 0 : i32
    %c0_i32_0 = arith.constant 0 : i32
    return %arg0, %c0_i32 : i32, i32
  }
  func.func @transform_1(%arg0: i32) -> (i32, i32) {
    %c0_i32 = arith.constant 0 : i32
    %c0_i32_0 = arith.constant 0 : i32
    %c0_i32_1 = arith.constant 0 : i32
    return %c0_i32, %c0_i32_0 : i32, i32
  }
  func.func @transform_2(%arg0: i32) -> (i32, i32) {
    %c0_i32 = arith.constant 0 : i32
    %c0_i32_0 = arith.constant 0 : i32
    %c0_i32_1 = arith.constant 0 : i32
    return %c0_i32, %c0_i32_0 : i32, i32
  }
  func.func @transform_3(%arg0: i32) -> (i32, i32) {
    %c0_i32 = arith.constant 0 : i32
    %c0_i32_0 = arith.constant 0 : i32
    return %arg0, %c0_i32 : i32, i32
  }
}

</mosaic_0001>

<llo_original>
// kernel: tpu_custom_call.1
$region0: #{tpu_custom_call.1}
  #allocation0 [shape = 'u32[]', space=smem, size = 0x4, offset = 0x4, fixed_abs, tag = 'smem constant byte address 0x4 - core index']
  #allocation1 [shape = 'u32[144,128]{1,0:T(1,128)}', space=vmem, size = 0x12000, scoped, tag = 'internal scratch']
  %s0 = inlined_call_operand.hbm [shape: f32[8,32], index: 0, kind: input, shape index: {}]
  %s1 = inlined_call_operand.hbm [shape: bf16[32,128], index: 1, kind: input, shape index: {}]
  %s2 = inlined_call_operand.vmem [shape: f32[1,128], index: 2, kind: input, shape index: {}]
  %s3 = inlined_call_operand.hbm [shape: f32[8,128], index: 3, kind: output, shape index: {}]
  %s4 = sld [smem:[#allocation0]]
  $region30: #{tpu_custom_call.1} parent=0
    _
  %s6 = ssub.s32 1, %s4
  %s7 = scalar_select 0, %s6, %s4
  $region1: #{tpu_custom_call.1} parent=0
    #allocation2 [shape = 'u8[4096]{0}', space=vmem, size = 0x1000, scoped, tag = 'input window, operand 0, single buffered']
    #allocation3 [shape = 's32[1]{0}', space=sflag, size = 0x4, scoped, tag = 'scoped memory for tpu_custom_call.1']
    #allocation4 [shape = 's32[1]{0}', space=sflag, size = 0x4, scoped, tag = 'scoped memory for tpu_custom_call.1']
    #allocation5 [shape = 'u8[8192]{0}', space=vmem, size = 0x2000, scoped, tag = 'input window, operand 1, single buffered']
    #allocation6 [shape = 's32[1]{0}', space=sflag, size = 0x4, scoped, tag = 'scoped memory for tpu_custom_call.1']
    #allocation7 [shape = 'u8[4096]{0}', space=vmem, size = 0x1000, scoped, tag = 'output window, operand 0, single buffered']
    %8 = vsyncpa [#allocation3], 0
    %9 = vsyncpa [#allocation6], 0
    %10 = vsyncpa [#allocation4], 0
    // Predicated region
    $region2: #{tpu_custom_call.1} parent=1 // pred_check
      _
    $region3: #{tpu_custom_call.1} parent=1 // pred_check_branch
      %12 = sbr.rel (0) target = $region5
    $region4: #{tpu_custom_call.1} parent=1 // pred_region
      %s14 = ssub.s32 128, 128
      %15 = vsyncadd [#allocation3], %s14
      %s17 = sshll.u32 [#allocation2], 4
      %s18 = int_to_ptr.vmem [resolvable:$true] %s17
      %20 = dma.hbm_to_vmem [thread:$0]  %s0, 128, %s18, [#allocation3]
    $region5: #{tpu_custom_call.1} parent=1 // pred_fallthru
      _
    // Predicated region
    $region6: #{tpu_custom_call.1} parent=1 // pred_check
      _
    $region7: #{tpu_custom_call.1} parent=1 // pred_check_branch
      %22 = sbr.rel (0) target = $region9
    $region8: #{tpu_custom_call.1} parent=1 // pred_region
      %s24 = ssub.s32 256, 256
      %25 = vsyncadd [#allocation6], %s24
      %s26 = sshll.u32 [#allocation5], 4
      %s27 = int_to_ptr.vmem [resolvable:$true] %s26
      %32 = dma.hbm_to_vmem [thread:$0]  %s1, 256, %s27, [#allocation6], 64, 64, 4
    $region9: #{tpu_custom_call.1} parent=1 // pred_fallthru
      _
    // Predicated region
    $region10: #{tpu_custom_call.1} parent=1 // pred_check
      _
    $region11: #{tpu_custom_call.1} parent=1 // pred_check_branch
      %34 = sbr.rel (0) target = $region13
    $region12: #{tpu_custom_call.1} parent=1 // pred_region
      _
    $region13: #{tpu_custom_call.1} parent=1 // pred_fallthru
      _
    // Predicated region
    $region14: #{tpu_custom_call.1} parent=1 // pred_check
      _
    $region15: #{tpu_custom_call.1} parent=1 // pred_check_branch
      %36 = sbr.rel (0) target = $region17
    $region16: #{tpu_custom_call.1} parent=1 // pred_region
      %37 = dma.done [#allocation3], 128
    $region17: #{tpu_custom_call.1} parent=1 // pred_fallthru
      _
    // Predicated region
    $region18: #{tpu_custom_call.1} parent=1 // pred_check
      _
    $region19: #{tpu_custom_call.1} parent=1 // pred_check_branch
      %39 = sbr.rel (0) target = $region21
    $region20: #{tpu_custom_call.1} parent=1 // pred_region
      %40 = dma.done [#allocation6], 256
    $region21: #{tpu_custom_call.1} parent=1 // pred_fallthru
      _
    %v42 = vld [vmem:[#allocation2] sm:$0xff]
    %v43 = vpack.c.bf16 %v42, %v42
    %v44 = vld [vmem:[#allocation5] sm:$0xf]
    %v45 = vld [vmem:[#allocation5 + $0x4] sm:$0xf]
    %v46 = vld [vmem:[#allocation5 + $0x8] sm:$0xf]
    %v47 = vld [vmem:[#allocation5 + $0xc] sm:$0xf]
    %v48 = vld [vmem:[%s2] sm:$0x1]
    %v50 = vlaneseq
    %v51 = vshrl.u32 %v50, 7
    %v52 = vsub.s32 0, %v51
    %v53 = vrot.slane %v48, %v52
    %v59 = vunpack.c.l.b16 %v44
    %v60 = vunpack.c.l.b16 %v45
    %v61 = vunpack.c.l.b16 %v46
    %v62 = vunpack.c.l.b16 %v47
    %v63 = vpack.c.b16 %v60, %v59
    %v64 = vpack.c.b16 %v62, %v61
    %vm67 = vcmask 261120
    %v69 = vsel %vm67, %v43, 0
    %71 = vmatprep.subr.bf16.mxu0 0
    %72 = vmatpush1.bf16.msra.mxu0 0
    %73 = vmatprep.subr.bf16.mxu0 0
    %74 = vmatpush1.bf16.msra.mxu0 0
    %75 = vmatprep.subr.bf16.mxu0 0
    %76 = vmatpush1.bf16.msra.mxu0 0
    %77 = vmatprep.subr.bf16.mxu0 0
    %78 = vmatpush1.bf16.msra.mxu0 0
    %79 = vmatprep.subr.bf16.mxu0 0
    %80 = vmatpush1.bf16.msra.mxu0 0
    %81 = vmatprep.subr.bf16.mxu0 0
    %82 = vmatpush1.bf16.msra.mxu0 0
    %83 = vmatprep.subr.bf16.mxu0 0
    %84 = vmatpush1.bf16.msra.mxu0 %v64
    %85 = vmatprep.subr.bf16.mxu0 0
    %86 = vmatpush1.bf16.msra.mxu0 %v63
    %87 = vmatprep.subr.bf16.mxu0 0
    %88 = vmatpush2.bf16.msra.mxu0 0
    %89 = vmatprep.subr.bf16.mxu0 0
    %90 = vmatpush2.bf16.msra.mxu0 0
    %91 = vmatprep.subr.bf16.mxu0 0
    %92 = vmatpush2.bf16.msra.mxu0 0
    %93 = vmatprep.subr.bf16.mxu0 0
    %94 = vmatpush2.bf16.msra.mxu0 0
    %95 = vmatprep.subr.bf16.mxu0 0
    %96 = vmatpush2.bf16.msra.mxu0 0
    %97 = vmatprep.subr.bf16.mxu0 0
    %98 = vmatpush2.bf16.msra.mxu0 0
    %99 = vmatprep.subr.bf16.mxu0 0
    %100 = vmatpush2.bf16.msra.mxu0 0
    %101 = vmatprep.subr.bf16.mxu0 0
    %102 = vmatpush2.bf16.msra.mxu0 0
    %103 = vmatprep.mubr.bf16.mxu0 0
    %104 = vmatmul.mubr.bf16.gmra.mxu0 %v69
    %v105 = vpop.f32.mrf.mxu0
    %v106 = vadd.f32 %v53, %v105
    %v107 = vpop.f32.mrf.mxu0
    %v108 = vpop.f32.mrf.mxu0
    %v109 = vpop.f32.mrf.mxu0
    %110 = vdwg.mxu0
    %111 = vmax.xlane.f32.xlu0 %v106
    %v112 = vpop.xlane.xlu0 %111
    %v113 = vsub.f32 %v106, %v112
    %v114 = vmul.f32 %v113, 1.442695
    %v115 = vpow.pop %v114
    %116 = vadd.xlane.f32.xlu0 %v115
    %v117 = vpop.xlane.xlu0 %116
    %v118 = vrcp.pop %v117
    %v119 = vmul.f32 %v115, %v118
    %120 = vst [vmem:[#allocation7] sm:$0xff] %v119
    // Predicated region
    $region22: #{tpu_custom_call.1} parent=1 // pred_check
      _
    $region23: #{tpu_custom_call.1} parent=1 // pred_check_branch
      %122 = sbr.rel (0) target = $region25
    $region24: #{tpu_custom_call.1} parent=1 // pred_region
      %s124 = ssub.s32 128, 128
      %125 = vsyncadd [#allocation4], %s124
      %s127 = sshll.u32 [#allocation7], 4
      %s128 = int_to_ptr.vmem [resolvable:$true] %s127
      %130 = dma.vmem_to_hbm [thread:$0]  %s128, 128, %s3, [#allocation4]
    $region25: #{tpu_custom_call.1} parent=1 // pred_fallthru
      _
    // Predicated region
    $region26: #{tpu_custom_call.1} parent=1 // pred_check
      _
    $region27: #{tpu_custom_call.1} parent=1 // pred_check_branch
      %132 = sbr.rel (0) target = $region29
    $region28: #{tpu_custom_call.1} parent=1 // pred_region
      %133 = dma.done [#allocation4], 128
    $region29: #{tpu_custom_call.1} parent=1 // pred_fallthru
      _
    %134 = vsyncpa [#allocation3], 1
    %135 = vsyncpa [#allocation6], 1
    %136 = vsyncpa [#allocation4], 1

</llo_original>
